<compile_context>
chip_gen: v7x
topology: tpu7x:2x2x1
jax: 0.10.0
libtpu: 0.0.40
codegen_flags: <defaults>
</compile_context>

<pallas_src>
import functools
import math

import jax
import jax.numpy as jnp
from jax.experimental import pallas as pl
from jax.experimental.pallas import tpu as pltpu


# --------------------------------------------------------------------------
# Kernels
# --------------------------------------------------------------------------
def _grad_kernel(colidx_ref, x_ref, o_ref, *, w):
    """x_ref/o_ref: (tb, H, TL); colidx_ref: (1, 1, TL) column-within-slab.

    Every (H, TL) slice holds whole slabs side by side along the lane axis
    (TL == W for the slab-batched layout, TL == k*W for the packed layout), so
    the vertical gradient never crosses a slab and the horizontal seams /
    image borders are exactly where colidx == 0 or W-1.
    """
    x = x_ref[...].astype(jnp.float32)
    _tb, hh, tl = x.shape
    col = colidx_ref[...]                                   # (1, 1, TL) int32

    # Vertical: x[i+1, j] - x[i-1, j], zero padded at i = 0 / H-1.
    if hh > 1:
        row = jax.lax.broadcasted_iota(jnp.int32, (1, hh, 1), 1)
        x_dn = pltpu.roll(x, hh - 1, 1)    # x[i+1, j] (wrap row -> masked)
        x_up = pltpu.roll(x, 1, 1)         # x[i-1, j] (wrap row -> masked)
        acc_v = (jnp.where(row < hh - 1, x_dn, 0.0)
                 - jnp.where(row > 0, x_up, 0.0))
    else:
        acc_v = jnp.zeros_like(x)

    # Horizontal: x[i, j+1] - x[i, j-1], zero padded at j = 0 / W-1.
    if w > 1:
        x_rt = pltpu.roll(x, tl - 1, 2)    # x[i, j+1] (wrap/seam -> masked)
        x_lt = pltpu.roll(x, 1, 2)         # x[i, j-1] (wrap/seam -> masked)
        acc_h = (jnp.where(col < w - 1, x_rt, 0.0)
                 - jnp.where(col > 0, x_lt, 0.0))
    else:
        acc_h = jnp.zeros_like(x)

    o_ref[...] = jnp.sqrt(acc_v * acc_v + acc_h * acc_h + 1e-6).astype(o_ref.dtype)


def _grad_kernel_rowtiled(x_ref, top_ref, bot_ref, o_ref, *, w):
    """Row-tiled path.  x_ref/o_ref: (1, TH, W); top/bot_ref: (1, 1, 1, W).

    The halo rows already carry the zero padding at the global image border,
    so no extra row masks are needed for the vertical gradient.
    """
    x = x_ref[...].astype(jnp.float32)                       # (1, TH, W)
    top = top_ref[...].reshape(1, 1, w).astype(jnp.float32)  # row  r*TH - 1 (or 0)
    bot = bot_ref[...].reshape(1, 1, w).astype(jnp.float32)  # row (r+1)*TH (or 0)
    _, th, tl = x.shape

    lrow = jax.lax.broadcasted_iota(jnp.int32, (1, th, 1), 1)
    col = jax.lax.broadcasted_iota(jnp.int32, (1, 1, tl), 2)

    x_up = jnp.where(lrow == 0, top, pltpu.roll(x, 1, 1))            # x[i-1, j]
    x_dn = jnp.where(lrow == th - 1, bot, pltpu.roll(x, th - 1, 1))  # x[i+1, j]
    acc_v = x_dn - x_up

    x_rt = pltpu.roll(x, tl - 1, 2)
    x_lt = pltpu.roll(x, 1, 2)
    acc_h = (jnp.where(col < w - 1, x_rt, 0.0)
             - jnp.where(col > 0, x_lt, 0.0))

    o_ref[...] = jnp.sqrt(acc_v * acc_v + acc_h * acc_h + 1e-6).astype(o_ref.dtype)


# --------------------------------------------------------------------------
# Sizing helpers
# --------------------------------------------------------------------------
def _round_up(a, m):
    return ((a + m - 1) // m) * m


@functools.lru_cache(maxsize=None)
def _vmem_budget():
    """Per-generation scoped-VMEM limit and target block size (f32 bytes)."""
    phys = None
    try:
        phys = int(pltpu.get_tpu_info().vmem_capacity_bytes)
    except Exception:
        phys = None
    if phys is not None and phys > 96 * 1024 * 1024:
        vmem_limit = 64 * 1024 * 1024      # v5e/v6e: 128 MiB physical VMEM
    else:
        vmem_limit = 44 * 1024 * 1024      # v7x (64 MiB physical) / unknown
    # Budget ~4 pipeline buffers (in+out double-buffered) plus ~8 f32
    # block-sized kernel temporaries, with headroom.
    target = min(4 * 1024 * 1024, int(0.75 * vmem_limit) // 12)
    return vmem_limit, max(target, 512 * 1024)


def _cost(elems, itemsize):
    # 4 selects + 2 sub + 2 mul + 2 add + compares/casts ~= 16 flops/elem.
    return pl.CostEstimate(flops=16 * elems, transcendentals=elems,
                           bytes_accessed=2 * elems * itemsize)


def _pick_row_tile(h, w, itemsize, target_bytes):
    """Largest sublane-aligned divisor of H whose (TH, W) f32 tile fits."""
    sub = max(8, 32 // max(1, itemsize))   # 8 (f32), 16 (bf16), 32 (int8)
    best = None
    th = sub
    while th <= h:
        if h % th == 0 and th * w * 4 <= target_bytes:
            best = th
        th += sub
    return best


# --------------------------------------------------------------------------
# pallas_call wrappers (three layouts, one shared stencil)
# --------------------------------------------------------------------------
def _call_packed(x_flat, target_bytes, vmem_limit):
    """W < 128: pack all slabs side by side along the lane axis (lane-dense
    stores), tile only along lanes at slab-aligned granularity."""
    nc, h, w = x_flat.shape
    dtype = x_flat.dtype
    lanes = nc * w
    lanes_p = _round_up(lanes, 128)

    xp = jnp.transpose(x_flat, (1, 0, 2)).reshape(h, lanes)
    if lanes_p != lanes:
        xp = jnp.pad(xp, ((0, 0), (0, lanes_p - lanes)))
    xp = xp.reshape(1, h, lanes_p)

    # Column-within-slab index (computed by XLA, not in-kernel): drives the
    # horizontal seam/border masks without any in-kernel modulo.
    colidx = (jnp.arange(lanes_p, dtype=jnp.int32) % w).reshape(1, 1, lanes_p)

    gran = math.lcm(w, 128)                 # lane tile: slab- and vreg-aligned
    tl = (max(1, target_bytes // (h * 4)) // gran) * gran
    tl = min(lanes_p, max(gran, tl))
    if tl >= lanes_p and lanes_p >= 2 * gran:
        # Prefer >= 2 grid steps (pipelining / second core) when possible.
        tl = max(gran, (lanes_p // 2) // gran * gran)
    grid = (pl.cdiv(lanes_p, tl),)
    # TODO(synk): halo row tiling for this path if H*gran*4 exceeds the budget.

    out = pl.pallas_call(
        functools.partial(_grad_kernel, w=w),
        out_shape=jax.ShapeDtypeStruct((1, h, lanes_p), dtype),
        grid=grid,
        in_specs=[pl.BlockSpec((1, 1, tl), lambda i: (0, 0, i)),
                  pl.BlockSpec((1, h, tl), lambda i: (0, 0, i))],
        out_specs=pl.BlockSpec((1, h, tl), lambda i: (0, 0, i)),
        compiler_params=pltpu.CompilerParams(
            dimension_semantics=("parallel",),
            vmem_limit_bytes=vmem_limit),
        cost_estimate=_cost(h * lanes_p, dtype.itemsize),
    )(colidx, xp)

    out = out.reshape(h, lanes_p)[:, :lanes].reshape(h, nc, w)
    return jnp.transpose(out, (1, 0, 2))


def _call_slabs(x_flat, target_bytes, vmem_limit):
    """W >= 128 and a whole (H, W) slab fits the budget: batch whole slabs."""
    nc, h, w = x_flat.shape
    dtype = x_flat.dtype
    slab_f32 = h * w * 4
    tb = max(1, target_bytes // slab_f32)
    # Keep at least min(nc, 4) grid steps; tb need not divide nc (cdiv grid,
    # the partial last block is masked by Pallas, slabs are independent).
    tb = max(1, min(tb, pl.cdiv(nc, min(nc, 4))))
    grid = (pl.cdiv(nc, tb),)

    colidx = jnp.arange(w, dtype=jnp.int32).reshape(1, 1, w)

    return pl.pallas_call(
        functools.partial(_grad_kernel, w=w),
        out_shape=jax.ShapeDtypeStruct((nc, h, w), dtype),
        grid=grid,
        in_specs=[pl.BlockSpec((1, 1, w), lambda i: (0, 0, 0)),
                  pl.BlockSpec((tb, h, w), lambda i: (i, 0, 0))],
        out_specs=pl.BlockSpec((tb, h, w), lambda i: (i, 0, 0)),
        compiler_params=pltpu.CompilerParams(
            dimension_semantics=("parallel",),
            vmem_limit_bytes=vmem_limit),
        cost_estimate=_cost(nc * h * w, dtype.itemsize),
    )(colidx, x_flat)


def _call_row_tiled(x_flat, th, vmem_limit):
    """W >= 128 and a single slab is too big: tile rows; the one-row halos
    (zero at the image border) are precomputed in the wrapper and streamed as
    tiny (1,1,1,W) blocks, so the vertical gradient needs no row masks."""
    nc, h, w = x_flat.shape
    dtype = x_flat.dtype
    n_tiles = h // th

    zero_row = jnp.zeros((nc, 1, w), dtype)
    top = jnp.concatenate([zero_row, x_flat[:, th - 1:h - 1:th, :]], axis=1)
    bot = jnp.concatenate([x_flat[:, th::th, :], zero_row], axis=1)
    top = top.reshape(nc, n_tiles, 1, w)    # top[s, r] = x[s, r*TH - 1] (or 0)
    bot = bot.reshape(nc, n_tiles, 1, w)    # bot[s, r] = x[s, (r+1)*TH] (or 0)

    return pl.pallas_call(
        functools.partial(_grad_kernel_rowtiled, w=w),
        out_shape=jax.ShapeDtypeStruct((nc, h, w), dtype),
        grid=(nc, n_tiles),
        in_specs=[pl.BlockSpec((1, th, w), lambda s, r: (s, r, 0)),
                  pl.BlockSpec((1, 1, 1, w), lambda s, r: (s, r, 0, 0)),
                  pl.BlockSpec((1, 1, 1, w), lambda s, r: (s, r, 0, 0))],
        out_specs=pl.BlockSpec((1, th, w), lambda s, r: (s, r, 0)),
        compiler_params=pltpu.CompilerParams(
            dimension_semantics=("parallel", "parallel"),
            vmem_limit_bytes=vmem_limit),
        cost_estimate=_cost(nc * h * w, dtype.itemsize),
    )(x_flat, top, bot)


# --------------------------------------------------------------------------
# Public entry point
# --------------------------------------------------------------------------
def get_gradient_nopadding(x, max_block_bytes=None):
    """Forward pass of Get_gradient_nopadding.  x: (N, 1, H, W)."""
    n, c, h, w = x.shape
    assert c == 1, "conv weight is (1, 1, 3, 3): requires in_channels == 1"
    nc = n * c
    itemsize = jnp.dtype(x.dtype).itemsize
    vmem_limit, auto_target = _vmem_budget()
    target_bytes = int(max_block_bytes) if max_block_bytes is not None else auto_target

    x_flat = x.reshape(nc, h, w)
    if w < 128:
        out_flat = _call_packed(x_flat, target_bytes, vmem_limit)
    elif h * w * 4 <= target_bytes:
        out_flat = _call_slabs(x_flat, target_bytes, vmem_limit)
    else:
        th = _pick_row_tile(h, w, itemsize, target_bytes)
        if th is None:
            # TODO(synk): no sublane-aligned divisor of H fits the budget;
            # fall back to whole-slab blocks (may need a larger VMEM limit).
            out_flat = _call_slabs(x_flat, h * w * 4, vmem_limit)
        else:
            out_flat = _call_row_tiled(x_flat, th, vmem_limit)
    return out_flat.reshape(n, c, h, w)


# --------------------------------------------------------------------------
# Pure-JAX reference (zero-padded central differences, identical math)
# --------------------------------------------------------------------------
def _reference(x):
    xp = jnp.pad(x, ((0, 0), (0, 0), (1, 1), (1, 1)))
    x_v = xp[:, :, 2:, 1:-1] - xp[:, :, :-2, 1:-1]   # x[i+1,j] - x[i-1,j]
    x_h = xp[:, :, 1:-1, 2:] - xp[:, :, 1:-1, :-2]   # x[i,j+1] - x[i,j-1]
    return jnp.sqrt(x_v ** 2 + x_h ** 2 + 1e-6)


if __name__ == "__main__":
    key = jax.random.PRNGKey(0)

    # Primary test (matches the module: conv weight (1,1,3,3) => C == 1).
    # Small plane -> lane-packed path.
    x1 = jax.random.normal(key, (2, 1, 16, 16), dtype=jnp.float32)
    out1 = jax.block_until_ready(get_gradient_nopadding(x1))
    ref1 = _reference(x1)
    assert out1.shape == ref1.shape and out1.dtype == ref1.dtype
    assert float(jnp.max(jnp.abs(out1 - ref1))) < 1e-5

    # Slab-batched path (W >= 128): tb=2, cdiv grid with a partial last block.
    x2 = jax.random.normal(jax.random.fold_in(key, 1), (5, 1, 16, 128),
                           dtype=jnp.float32)
    out2 = jax.block_until_ready(get_gradient_nopadding(x2))
    assert float(jnp.max(jnp.abs(out2 - _reference(x2)))) < 1e-5

    # Halo row-tiled path (forced small block budget): TH=32, grid (1, 2).
    x3 = jax.random.normal(jax.random.fold_in(key, 2), (1, 1, 64, 128),
                           dtype=jnp.float32)
    out3 = jax.block_until_ready(
        get_gradient_nopadding(x3, max_block_bytes=16 * 1024))
    assert float(jnp.max(jnp.abs(out3 - _reference(x3)))) < 1e-5

    print("KERNEL_OK")
</pallas_src>

<mosaic_0001>
module attributes {stable_mosaic.version = 11 : i64} {
  func.func @_grad_kernel(%arg0: i32, %arg1: memref<1x1x128xi32, #tpu.memory_space<vmem>>, %arg2: memref<1x16x128xf32, #tpu.memory_space<vmem>>, %arg3: memref<1x16x128xf32, #tpu.memory_space<vmem>>) attributes {dimension_semantics = [#tpu.dimension_semantics<parallel>], iteration_bounds = array<i64: 1>, scalar_prefetch = 0 : i64, scratch_operands = 0 : i64, tpu.core_type = #tpu.core_type<tc>, window_params = [{transform_indices = @transform_0, window_bounds = array<i64: 1, 1, 128>}, {transform_indices = @transform_1, window_bounds = array<i64: 1, 16, 128>}, {transform_indices = @transform_2, window_bounds = array<i64: 1, 16, 128>}]} {
    %c0 = arith.constant 0 : index
    %c0_0 = arith.constant 0 : index
    %c0_1 = arith.constant 0 : index
    %0 = vector.load %arg2[%c0, %c0_0, %c0_1] : memref<1x16x128xf32, #tpu.memory_space<vmem>>, vector<1x16x128xf32>
    %c0_2 = arith.constant 0 : index
    %c0_3 = arith.constant 0 : index
    %c0_4 = arith.constant 0 : index
    %1 = vector.load %arg1[%c0_2, %c0_3, %c0_4] : memref<1x1x128xi32, #tpu.memory_space<vmem>>, vector<1x1x128xi32>
    %2 = tpu.iota {dimensions = array<i32: 1>} : vector<1x16x1xi32>
    %c15_i32 = arith.constant 15 : i32
    %3 = tpu.dynamic_rotate %0 by %c15_i32 dim 1 : vector<1x16x128xf32>, i32 -> vector<1x16x128xf32>
    %c1_i32 = arith.constant 1 : i32
    %4 = tpu.dynamic_rotate %0 by %c1_i32 dim 1 : vector<1x16x128xf32>, i32 -> vector<1x16x128xf32>
    %c15_i32_5 = arith.constant 15 : i32
    %5 = vector.broadcast %c15_i32_5 : i32 to vector<1x16x1xi32>
    %6 = arith.cmpi slt, %2, %5 : vector<1x16x1xi32>
    %cst = arith.constant 0.000000e+00 : f32
    %7 = vector.shape_cast %6 : vector<1x16x1xi1> to vector<1x16x1xi1>
    %8 = vector.broadcast %7 : vector<1x16x1xi1> to vector<1x16x128xi1>
    %9 = vector.broadcast %cst : f32 to vector<1x16x128xf32>
    %10 = arith.select %8, %3, %9 : vector<1x16x128xi1>, vector<1x16x128xf32>
    %c0_i32 = arith.constant 0 : i32
    %11 = vector.broadcast %c0_i32 : i32 to vector<1x16x1xi32>
    %12 = arith.cmpi sgt, %2, %11 : vector<1x16x1xi32>
    %cst_6 = arith.constant 0.000000e+00 : f32
    %13 = vector.shape_cast %12 : vector<1x16x1xi1> to vector<1x16x1xi1>
    %14 = vector.broadcast %13 : vector<1x16x1xi1> to vector<1x16x128xi1>
    %15 = vector.broadcast %cst_6 : f32 to vector<1x16x128xf32>
    %16 = arith.select %14, %4, %15 : vector<1x16x128xi1>, vector<1x16x128xf32>
    %17 = arith.subf %10, %16 : vector<1x16x128xf32>
    %c127_i32 = arith.constant 127 : i32
    %18 = tpu.dynamic_rotate %0 by %c127_i32 dim 2 : vector<1x16x128xf32>, i32 -> vector<1x16x128xf32>
    %c1_i32_7 = arith.constant 1 : i32
    %19 = tpu.dynamic_rotate %0 by %c1_i32_7 dim 2 : vector<1x16x128xf32>, i32 -> vector<1x16x128xf32>
    %c15_i32_8 = arith.constant 15 : i32
    %20 = vector.broadcast %c15_i32_8 : i32 to vector<1x1x128xi32>
    %21 = arith.cmpi slt, %1, %20 : vector<1x1x128xi32>
    %cst_9 = arith.constant 0.000000e+00 : f32
    %22 = vector.shape_cast %21 : vector<1x1x128xi1> to vector<1x1x128xi1>
    %23 = vector.broadcast %22 : vector<1x1x128xi1> to vector<1x16x128xi1>
    %24 = vector.broadcast %cst_9 : f32 to vector<1x16x128xf32>
    %25 = arith.select %23, %18, %24 : vector<1x16x128xi1>, vector<1x16x128xf32>
    %c0_i32_10 = arith.constant 0 : i32
    %26 = vector.broadcast %c0_i32_10 : i32 to vector<1x1x128xi32>
    %27 = arith.cmpi sgt, %1, %26 : vector<1x1x128xi32>
    %cst_11 = arith.constant 0.000000e+00 : f32
    %28 = vector.shape_cast %27 : vector<1x1x128xi1> to vector<1x1x128xi1>
    %29 = vector.broadcast %28 : vector<1x1x128xi1> to vector<1x16x128xi1>
    %30 = vector.broadcast %cst_11 : f32 to vector<1x16x128xf32>
    %31 = arith.select %29, %19, %30 : vector<1x16x128xi1>, vector<1x16x128xf32>
    %32 = arith.subf %25, %31 : vector<1x16x128xf32>
    %33 = arith.mulf %17, %17 : vector<1x16x128xf32>
    %34 = arith.mulf %32, %32 : vector<1x16x128xf32>
    %35 = arith.addf %33, %34 : vector<1x16x128xf32>
    %cst_12 = arith.constant 9.99999997E-7 : f32
    %36 = vector.broadcast %cst_12 : f32 to vector<1x16x128xf32>
    %37 = arith.addf %35, %36 : vector<1x16x128xf32>
    %38 = math.sqrt %37 : vector<1x16x128xf32>
    %c0_13 = arith.constant 0 : index
    %c0_14 = arith.constant 0 : index
    %c0_15 = arith.constant 0 : index
    %39 = vector.load %arg3[%c0_13, %c0_14, %c0_15] : memref<1x16x128xf32, #tpu.memory_space<vmem>>, vector<1x16x128xf32>
    tpu.vector_store %arg3[%c0_13, %c0_14, %c0_15], %38 {strides = array<i32>} : memref<1x16x128xf32, #tpu.memory_space<vmem>>, vector<1x16x128xf32>,
    return
  }
  func.func @transform_0(%arg0: i32) -> (i32, i32, i32) {
    %c0_i32 = arith.constant 0 : i32
    %c0_i32_0 = arith.constant 0 : i32
    %c0_i32_1 = arith.constant 0 : i32
    return %c0_i32, %c0_i32_0, %arg0 : i32, i32, i32
  }
  func.func @transform_1(%arg0: i32) -> (i32, i32, i32) {
    %c0_i32 = arith.constant 0 : i32
    %c0_i32_0 = arith.constant 0 : i32
    %c0_i32_1 = arith.constant 0 : i32
    return %c0_i32, %c0_i32_0, %arg0 : i32, i32, i32
  }
  func.func @transform_2(%arg0: i32) -> (i32, i32, i32) {
    %c0_i32 = arith.constant 0 : i32
    %c0_i32_0 = arith.constant 0 : i32
    %c0_i32_1 = arith.constant 0 : i32
    return %c0_i32, %c0_i32_0, %arg0 : i32, i32, i32
  }
}

</mosaic_0001>

<llo_original>
// kernel: tpu_custom_call.1
$region0: #{tpu_custom_call.1}
  #allocation0 [shape = 'u32[]', space=smem, size = 0x4, offset = 0x4, fixed_abs, tag = 'smem constant byte address 0x4 - core index']
  #allocation1 [shape = 'u32[144,128]{1,0:T(1,128)}', space=vmem, size = 0x12000, scoped, tag = 'internal scratch']
  %s0 = inlined_call_operand.hbm [shape: s32[1,1,128], index: 0, kind: input, shape index: {}]
  %s1 = inlined_call_operand.hbm [shape: f32[1,16,128], index: 1, kind: input, shape index: {}]
  %s2 = inlined_call_operand.hbm [shape: f32[1,16,128], index: 2, kind: output, shape index: {}]
  %s3 = sld [smem:[#allocation0]]
  $region26: #{tpu_custom_call.1} parent=0
    _
  %s5 = ssub.s32 1, %s3
  %s6 = scalar_select 0, %s5, %s3
  $region1: #{tpu_custom_call.1} parent=0
    #allocation2 [shape = 'u8[512]{0}', space=vmem, size = 0x400, scoped, tag = 'input window, operand 0, single buffered']
    #allocation3 [shape = 's32[1]{0}', space=sflag, size = 0x4, scoped, tag = 'scoped memory for tpu_custom_call.1']
    #allocation4 [shape = 's32[1]{0}', space=sflag, size = 0x4, scoped, tag = 'scoped memory for tpu_custom_call.1']
    #allocation5 [shape = 'u8[8192]{0}', space=vmem, size = 0x2000, scoped, tag = 'input window, operand 1, single buffered']
    #allocation6 [shape = 's32[1]{0}', space=sflag, size = 0x4, scoped, tag = 'scoped memory for tpu_custom_call.1']
    #allocation7 [shape = 'u8[8192]{0}', space=vmem, size = 0x2000, scoped, tag = 'output window, operand 0, single buffered']
    %7 = vsyncpa [#allocation3], 0
    %8 = vsyncpa [#allocation6], 0
    %9 = vsyncpa [#allocation4], 0
    // Predicated region
    $region2: #{tpu_custom_call.1} parent=1 // pred_check
      _
    $region3: #{tpu_custom_call.1} parent=1 // pred_check_branch
      %11 = sbr.rel (0) target = $region5
    $region4: #{tpu_custom_call.1} parent=1 // pred_region
      %s13 = ssub.s32 16, 16
      %14 = vsyncadd [#allocation3], %s13
      %s16 = sshll.u32 [#allocation2], 4
      %s17 = int_to_ptr.vmem [resolvable:$true] %s16
      %19 = dma.hbm_to_vmem [thread:$0]  %s0, 16, %s17, [#allocation3]
    $region5: #{tpu_custom_call.1} parent=1 // pred_fallthru
      _
    // Predicated region
    $region6: #{tpu_custom_call.1} parent=1 // pred_check
      _
    $region7: #{tpu_custom_call.1} parent=1 // pred_check_branch
      %21 = sbr.rel (0) target = $region9
    $region8: #{tpu_custom_call.1} parent=1 // pred_region
      %s23 = ssub.s32 256, 256
      %24 = vsyncadd [#allocation6], %s23
      %s25 = sshll.u32 [#allocation5], 4
      %s26 = int_to_ptr.vmem [resolvable:$true] %s25
      %31 = dma.hbm_to_vmem [thread:$0]  %s1, 256, %s26, [#allocation6], 128, 128, 8
    $region9: #{tpu_custom_call.1} parent=1 // pred_fallthru
      _
    // Predicated region
    $region10: #{tpu_custom_call.1} parent=1 // pred_check
      _
    $region11: #{tpu_custom_call.1} parent=1 // pred_check_branch
      %33 = sbr.rel (0) target = $region13
    $region12: #{tpu_custom_call.1} parent=1 // pred_region
      %34 = dma.done [#allocation3], 16
    $region13: #{tpu_custom_call.1} parent=1 // pred_fallthru
      _
    // Predicated region
    $region14: #{tpu_custom_call.1} parent=1 // pred_check
      _
    $region15: #{tpu_custom_call.1} parent=1 // pred_check_branch
      %36 = sbr.rel (0) target = $region17
    $region16: #{tpu_custom_call.1} parent=1 // pred_region
      %37 = dma.done [#allocation6], 256
    $region17: #{tpu_custom_call.1} parent=1 // pred_fallthru
      _
    %v38 = vld [vmem:[#allocation5] sm:$0xff]
    %v39 = vld [vmem:[#allocation5 + $0x8] sm:$0xff]
    %v40 = vld [vmem:[#allocation2] sm:$0x1]
    %v41 = vlaneseq
    %v42 = vshrl.u32 %v41, 7
    %v43 = vadd.s32 %v42, 8
    %v44 = vrot.slane %v38, 1
    %v45 = vrot.slane %v39, 1
    %vm46 = vcmp.lt.s32.totalorder %v42, 7
    %v47 = vsel %vm46, %v44, %v45
    %v48 = vsel %vm46, %v45, %v44
    %v49 = vrot.slane %v38, 7
    %v50 = vrot.slane %v39, 7
    %vm51 = vcmp.lt.s32.totalorder %v42, 1
    %v52 = vsel %vm51, %v49, %v50
    %v53 = vsel %vm51, %v50, %v49
    %vm54 = vcmp.lt.s32.totalorder %v42, 15
    %vm55 = vcmp.lt.s32.totalorder %v43, 15
    %v56 = vsel %vm54, 1, 0
    %v57 = vsel %vm55, 1, 0
    %vm58 = vcmp.eq.s32.totalorder %v56, 1
    %vm59 = vcmp.eq.s32.totalorder %v57, 1
    %v60 = vsel %vm58, %v47, 0.0
    %v61 = vsel %vm59, %v48, 0.0
    %vm62 = vcmp.gt.s32.totalorder %v42, 0
    %vm63 = vcmp.gt.s32.totalorder %v43, 0
    %v64 = vsel %vm62, 1, 0
    %v65 = vsel %vm63, 1, 0
    %vm66 = vcmp.eq.s32.totalorder %v64, 1
    %vm67 = vcmp.eq.s32.totalorder %v65, 1
    %v68 = vsel %vm66, %v53, 0.0
    %v69 = vsel %vm67, %v52, 0.0
    %v70 = vsub.f32 %v60, %v68
    %v71 = vsub.f32 %v61, %v69
    %72 = vrot.lane.b32.xlu0 %v38, 127
    %v73 = vpop.permute.xlu0 %72
    %74 = vrot.lane.b32.xlu0 %v39, 127
    %v75 = vpop.permute.xlu0 %74
    %76 = vrot.lane.b32.xlu0 %v38, 1
    %v77 = vpop.permute.xlu0 %76
    %78 = vrot.lane.b32.xlu0 %v39, 1
    %v79 = vpop.permute.xlu0 %78
    %vm80 = vcmp.lt.s32.totalorder %v40, 15
    %v81 = vsel %vm80, 1, 0
    %v82 = vlaneseq
    %v83 = vshrl.u32 %v82, 7
    %v84 = vsub.s32 0, %v83
    %v85 = vrot.slane %v81, %v84
    %vm86 = vcmp.eq.s32.totalorder %v85, 1
    %v87 = vsel %vm86, %v73, 0.0
    %v88 = vsel %vm86, %v75, 0.0
    %vm89 = vcmp.gt.s32.totalorder %v40, 0
    %v90 = vsel %vm89, 1, 0
    %v91 = vlaneseq
    %v92 = vshrl.u32 %v91, 7
    %v93 = vsub.s32 0, %v92
    %v94 = vrot.slane %v90, %v93
    %vm95 = vcmp.eq.s32.totalorder %v94, 1
    %v96 = vsel %vm95, %v77, 0.0
    %v97 = vsel %vm95, %v79, 0.0
    %v98 = vsub.f32 %v87, %v96
    %v99 = vsub.f32 %v88, %v97
    %v100 = vmul.f32 %v70, %v70
    %v101 = vmul.f32 %v71, %v71
    %v102 = vmul.f32 %v98, %v98
    %v103 = vmul.f32 %v99, %v99
    %v104 = vadd.f32 %v100, %v102
    %v105 = vadd.f32 %v101, %v103
    %v106 = vadd.f32 %v104, 1e-06
    %v107 = vadd.f32 %v105, 1e-06
    %v108 = vrsqrt.pop %v106
    %v109 = vmul.f32 %v106, %v108
    %vm110 = vcmp.eq.f32.partialorder %v106, inf
    %v111 = vsel %vm110, %v106, %v109
    %vm112 = vcmp.eq.f32.partialorder %v106, 0.0
    %v113 = vand.u32 %v106, 2147483648
    %v114 = vsel %vm112, %v113, %v111
    %v115 = vrsqrt.pop %v107
    %v116 = vmul.f32 %v107, %v115
    %vm117 = vcmp.eq.f32.partialorder %v107, inf
    %v118 = vsel %vm117, %v107, %v116
    %vm119 = vcmp.eq.f32.partialorder %v107, 0.0
    %v120 = vand.u32 %v107, 2147483648
    %v121 = vsel %vm119, %v120, %v118
    %122 = vst [vmem:[#allocation7] sm:$0xff] %v114
    %123 = vst [vmem:[#allocation7 + $0x8] sm:$0xff] %v121
    // Predicated region
    $region18: #{tpu_custom_call.1} parent=1 // pred_check
      _
    $region19: #{tpu_custom_call.1} parent=1 // pred_check_branch
      %125 = sbr.rel (0) target = $region21
    $region20: #{tpu_custom_call.1} parent=1 // pred_region
      %s127 = ssub.s32 256, 256
      %128 = vsyncadd [#allocation4], %s127
      %s129 = sshll.u32 [#allocation7], 4
      %s130 = int_to_ptr.vmem [resolvable:$true] %s129
      %135 = dma.vmem_to_hbm [thread:$0]  %s130, 256, %s2, [#allocation4], 128, 128, 8
    $region21: #{tpu_custom_call.1} parent=1 // pred_fallthru
      _
    // Predicated region
    $region22: #{tpu_custom_call.1} parent=1 // pred_check
      _
    $region23: #{tpu_custom_call.1} parent=1 // pred_check_branch
      %137 = sbr.rel (0) target = $region25
    $region24: #{tpu_custom_call.1} parent=1 // pred_region
      %138 = dma.done [#allocation4], 256
    $region25: #{tpu_custom_call.1} parent=1 // pred_fallthru
      _
    %139 = vsyncpa [#allocation3], 1
    %140 = vsyncpa [#allocation6], 1
    %141 = vsyncpa [#allocation4], 1

</llo_original>
